<compile_context>
chip_gen: v7x
topology: tpu7x:2x2x1
jax: 0.10.0
libtpu: 0.0.40
codegen_flags: <defaults>
</compile_context>

<pallas_src>
import functools

import jax
import jax.numpy as jnp
from jax.experimental import pallas as pl
from jax.experimental.pallas import tpu as pltpu


LANE = 128


def _round_up(x, m):
    return ((x + m - 1) // m) * m


def _has_two_tensorcores():
    """v7x has 2 TensorCores per chip; v5e/v6e have 1."""
    try:
        return "v7" in jax.devices()[0].device_kind.lower()
    except Exception:  # pragma: no cover - defensive
        return False


def _choose_token_tile(total_tokens):
    for t in (2048, 1024, 512, 256, 128):
        if total_tokens >= 2 * t:
            return t
    # Tiny inputs: only split into two tiles when a second TensorCore exists
    # (v7x); on single-TC chips an extra grid step is pure serial overhead.
    if _has_two_tensorcores() and total_tokens > 16:
        half = (total_tokens + 1) // 2
        return _round_up(half, 16)          # 16-row multiples: full bf16 packing
    return _round_up(max(total_tokens, 16), 16)


# ---------------------------------------------------------------------------
# Kernel (per token tile):
#   h   = x_tok @ W_fused + b_fused          [T_tile, D_pad]   (one MXU dot;
#         lanes [0,Dv) = ViT patch-embed, [Dv,Dv+De) = pooled EffNet stem)
#   act = h * sigmoid(scale * h)             scale=1.702 on ViT lanes (GELU,
#         sigmoid approx), 1.0 on EffNet lanes (SiLU) — one EUP op per lane
#   out = act @ W_conv + b_conv              [T_tile, N_pad]   (1x1 conv),
#         stored bf16 (lane-dense, half-width writeback)
# ---------------------------------------------------------------------------
def ensemble_kernel(x_ref, wf_ref, bf_ref, scale_ref, wc_ref, bc_ref, o_ref):
    h = jnp.dot(x_ref[...], wf_ref[...], preferred_element_type=jnp.float32)
    h = h + bf_ref[...]

    act = h * jax.nn.sigmoid(h * scale_ref[...])

    out = jnp.dot(act.astype(wc_ref.dtype), wc_ref[...],
                  preferred_element_type=jnp.float32)
    o_ref[...] = (out + bc_ref[...]).astype(o_ref.dtype)


def prepare_params(params, *, patch):
    """One-time weight preparation (hoisted off the per-call path).

    Folds the P*P average pool into the patch matmul algebraically
    (x_pool @ W_eff == x_patches @ (tile(W_eff, P*P) / (P*P))), concatenates the
    two branch weights so their outputs land on disjoint lanes, zero-pads every
    contraction / lane dim to 128 and casts MXU operands to bf16.  Also builds
    the per-lane activation-scale row (1.702 -> sigmoid-approx GELU on ViT
    lanes, 1.0 -> SiLU on EffNet lanes).
    """
    wv, bv, we, be, wc, bc = params
    pd, d_vit = wv.shape
    d_eff = we.shape[1]
    d_cat = d_vit + d_eff
    num_classes = wc.shape[1]

    k_pad = _round_up(max(pd, LANE), LANE)
    d_pad = _round_up(max(d_cat, LANE), LANE)
    n_pad = _round_up(max(num_classes, LANE), LANE)

    we_exp = jnp.tile(we, (patch * patch, 1)) / float(patch * patch)
    w_fused = jnp.concatenate([wv, we_exp], axis=1)            # [Pd, Dv+De]
    b_fused = jnp.concatenate([bv, be], axis=1)                # [1,  Dv+De]

    w_fused = jnp.pad(w_fused, ((0, k_pad - pd), (0, d_pad - d_cat)))
    b_fused = jnp.pad(b_fused, ((0, 0), (0, d_pad - d_cat))).astype(jnp.float32)
    w_conv = jnp.pad(wc, ((0, d_pad - d_cat), (0, n_pad - num_classes)))
    b_conv = jnp.pad(bc, ((0, 0), (0, n_pad - num_classes))).astype(jnp.float32)

    lane = jnp.arange(d_pad)
    act_scale = jnp.where(lane < d_vit, 1.702, 1.0).astype(jnp.float32)[None, :]

    return (w_fused.astype(jnp.bfloat16), b_fused, act_scale,
            w_conv.astype(jnp.bfloat16), b_conv)


def ensemble_forward(x, prepared, *, patch, num_classes, token_tile=None):
    """x: NCHW float32 [B, C, H, W] (PyTorch convention)."""
    w_fused, b_fused, act_scale, w_conv, b_conv = prepared
    B, C, H, W = x.shape
    Hp, Wp = H // patch, W // patch
    Np = Hp * Wp
    Pd = patch * patch * C
    K_pad, D_pad = w_fused.shape
    N_pad = w_conv.shape[1]

    # --- patchify NCHW -> [B*Np, Pd] (channels fastest inside a patch) -------
    # allow_input_fusion lets XLA fuse this transpose / pad / cast into the
    # pallas_call input instead of round-tripping the token buffer via HBM.
    x6 = x.reshape(B, C, Hp, patch, Wp, patch)
    x_tok = x6.transpose(0, 2, 4, 3, 5, 1).reshape(B * Np, Pd)
    x_tok = jnp.pad(x_tok, ((0, 0), (0, K_pad - Pd)))

    T = B * Np
    tile = token_tile or _choose_token_tile(T)
    T_pad = _round_up(T, tile)
    if T_pad != T:
        x_tok = jnp.pad(x_tok, ((0, T_pad - T), (0, 0)))
    x_tok = x_tok.astype(jnp.bfloat16)

    out = pl.pallas_call(
        ensemble_kernel,
        out_shape=jax.ShapeDtypeStruct((T_pad, N_pad), jnp.bfloat16),
        grid_spec=pltpu.PrefetchScalarGridSpec(
            num_scalar_prefetch=0,
            grid=(T_pad // tile,),
            in_specs=[
                pl.BlockSpec((tile, K_pad), lambda i: (i, 0)),    # tokens
                pl.BlockSpec((K_pad, D_pad), lambda i: (0, 0)),   # W_fused (resident)
                pl.BlockSpec((1, D_pad), lambda i: (0, 0)),       # b_fused
                pl.BlockSpec((1, D_pad), lambda i: (0, 0)),       # activation scale
                pl.BlockSpec((D_pad, N_pad), lambda i: (0, 0)),   # W_conv (1x1, resident)
                pl.BlockSpec((1, N_pad), lambda i: (0, 0)),       # b_conv
            ],
            out_specs=pl.BlockSpec((tile, N_pad), lambda i: (i, 0)),
        ),
        compiler_params=pltpu.CompilerParams(
            dimension_semantics=("parallel",),
            vmem_limit_bytes=32 * 1024 * 1024,
            allow_input_fusion=[True, False, False, False, False, False],
        ),
    )(x_tok, w_fused, b_fused, act_scale, w_conv, b_conv)

    # slice padding off, back to PyTorch-like 1x1-conv output [B, nc, Hp, Wp]
    out = out[:T, :num_classes].astype(jnp.float32)
    return out.reshape(B, Hp, Wp, num_classes).transpose(0, 3, 1, 2)


def init_params(key, *, in_ch=4, patch=4, d_vit=32, d_eff=32, num_classes=8):
    """Deterministic synthetic parameters (stand-in for the pretrained nets)."""
    k1, k2, k3, k4, k5, k6 = jax.random.split(key, 6)
    pd = patch * patch * in_ch
    wv = jax.random.normal(k1, (pd, d_vit), jnp.float32) * 0.05
    bv = jax.random.normal(k2, (1, d_vit), jnp.float32) * 0.01
    we = jax.random.normal(k3, (in_ch, d_eff), jnp.float32) * 0.05
    be = jax.random.normal(k4, (1, d_eff), jnp.float32) * 0.01
    wc = jax.random.normal(k5, (d_vit + d_eff, num_classes), jnp.float32) * 0.05
    bc = jax.random.normal(k6, (1, num_classes), jnp.float32) * 0.01
    return wv, bv, we, be, wc, bc


def reference_forward(x, params, *, patch=4):
    """Pure-JAX reference of the same (stand-in) computation, un-fused, with
    matching bf16 matmul operands / f32 accumulation and the same activation
    forms as the kernel (sigmoid-approx GELU on the ViT branch, SiLU on the
    EffNet branch)."""
    wv, bv, we, be, wc, bc = params
    B, C, H, W = x.shape
    Hp, Wp = H // patch, W // patch
    Np = Hp * Wp
    bf = jnp.bfloat16

    x6 = x.reshape(B, C, Hp, patch, Wp, patch)
    xp = x6.transpose(0, 2, 4, 3, 5, 1).reshape(B, Np, -1)
    xpool = x6.mean(axis=(3, 5)).transpose(0, 2, 3, 1).reshape(B, Np, C)

    vit = jnp.dot(xp.astype(bf), wv.astype(bf),
                  preferred_element_type=jnp.float32) + bv
    vit = vit * jax.nn.sigmoid(1.702 * vit)               # sigmoid-approx GELU
    eff = jnp.dot(xpool.astype(bf), we.astype(bf),
                  preferred_element_type=jnp.float32) + be
    eff = jax.nn.silu(eff)
    cat = jnp.concatenate([vit, eff], axis=-1)            # torch.cat over channels
    out = jnp.dot(cat.astype(bf), wc.astype(bf),
                  preferred_element_type=jnp.float32) + bc    # 1x1 conv
    return out.reshape(B, Hp, Wp, -1).transpose(0, 3, 1, 2)


if __name__ == "__main__":
    key = jax.random.PRNGKey(0)
    kx, kp = jax.random.split(key)

    B, C, H, W = 2, 4, 16, 16            # small NCHW image, PyTorch-style input
    patch = 4
    num_classes = 8
    x = jax.random.normal(kx, (B, C, H, W), jnp.float32)
    params = init_params(kp, in_ch=C, patch=patch, d_vit=32, d_eff=32,
                         num_classes=num_classes)

    # One-time weight prep (hoisted off the per-call path), then a jitted
    # forward so patchify/pad/cast can fuse into the pallas_call input.
    prepared = jax.tree_util.tree_map(jax.block_until_ready,
                                      prepare_params(params, patch=patch))
    fwd = jax.jit(functools.partial(ensemble_forward, patch=patch,
                                    num_classes=num_classes))

    out = jax.block_until_ready(fwd(x, prepared))
    ref = reference_forward(x, params, patch=patch)

    assert out.shape == (B, num_classes, H // patch, W // patch), out.shape
    assert jnp.allclose(out, ref, atol=5e-3, rtol=5e-3), "mismatch vs reference"

    print("KERNEL_OK")
</pallas_src>

<mosaic_0001>
module attributes {stable_mosaic.version = 11 : i64} {
  func.func @ensemble_kernel(%arg0: i32, %arg1: memref<32x128xbf16, #tpu.memory_space<vmem>>, %arg2: memref<128x128xbf16, #tpu.memory_space<vmem>>, %arg3: memref<1x128xf32, #tpu.memory_space<vmem>>, %arg4: memref<1x128xf32, #tpu.memory_space<vmem>>, %arg5: memref<128x128xbf16, #tpu.memory_space<vmem>>, %arg6: memref<1x128xf32, #tpu.memory_space<vmem>>, %arg7: memref<32x128xbf16, #tpu.memory_space<vmem>>) attributes {dimension_semantics = [#tpu.dimension_semantics<parallel>], iteration_bounds = array<i64: 1>, scalar_prefetch = 0 : i64, scratch_operands = 0 : i64, tpu.core_type = #tpu.core_type<tc>, window_params = [{transform_indices = @transform_0, window_bounds = array<i64: 32, 128>}, {pipeline_mode = #tpu.pipeline_mode<synchronous>, transform_indices = @transform_1, window_bounds = array<i64: 128, 128>}, {pipeline_mode = #tpu.pipeline_mode<synchronous>, transform_indices = @transform_2, window_bounds = array<i64: 1, 128>}, {pipeline_mode = #tpu.pipeline_mode<synchronous>, transform_indices = @transform_3, window_bounds = array<i64: 1, 128>}, {pipeline_mode = #tpu.pipeline_mode<synchronous>, transform_indices = @transform_4, window_bounds = array<i64: 128, 128>}, {pipeline_mode = #tpu.pipeline_mode<synchronous>, transform_indices = @transform_5, window_bounds = array<i64: 1, 128>}, {transform_indices = @transform_6, window_bounds = array<i64: 32, 128>}]} {
    %c0 = arith.constant 0 : index
    %c0_0 = arith.constant 0 : index
    %0 = vector.load %arg1[%c0, %c0_0] : memref<32x128xbf16, #tpu.memory_space<vmem>>, vector<32x128xbf16>
    %c0_1 = arith.constant 0 : index
    %c0_2 = arith.constant 0 : index
    %1 = vector.load %arg2[%c0_1, %c0_2] : memref<128x128xbf16, #tpu.memory_space<vmem>>, vector<128x128xbf16>
    %cst = arith.constant dense<0.000000e+00> : vector<32x128xf32>
    %2 = tpu.matmul %0, %1, %cst {dimension_numbers = #tpu.dot_dimension_numbers<[1], [0], [0], [1], [0, 0, 1, 1], [], []>} : vector<32x128xbf16>, vector<128x128xbf16>, vector<32x128xf32> -> vector<32x128xf32>
    %c0_3 = arith.constant 0 : index
    %c0_4 = arith.constant 0 : index
    %3 = vector.load %arg3[%c0_3, %c0_4] : memref<1x128xf32, #tpu.memory_space<vmem>>, vector<1x128xf32>
    %4 = vector.broadcast %3 : vector<1x128xf32> to vector<32x128xf32>
    %5 = arith.addf %2, %4 : vector<32x128xf32>
    %c0_5 = arith.constant 0 : index
    %c0_6 = arith.constant 0 : index
    %6 = vector.load %arg4[%c0_5, %c0_6] : memref<1x128xf32, #tpu.memory_space<vmem>>, vector<1x128xf32>
    %7 = vector.broadcast %6 : vector<1x128xf32> to vector<32x128xf32>
    %8 = arith.mulf %5, %7 : vector<32x128xf32>
    %9 = arith.negf %8 : vector<32x128xf32>
    %10 = math.exp %9 : vector<32x128xf32>
    %cst_7 = arith.constant 1.000000e+00 : f32
    %11 = vector.broadcast %cst_7 : f32 to vector<32x128xf32>
    %12 = arith.addf %11, %10 : vector<32x128xf32>
    %13 = arith.divf %11, %12 : vector<32x128xf32>
    %14 = arith.mulf %5, %13 : vector<32x128xf32>
    %15 = arith.truncf %14 : vector<32x128xf32> to vector<32x128xbf16>
    %c0_8 = arith.constant 0 : index
    %c0_9 = arith.constant 0 : index
    %16 = vector.load %arg5[%c0_8, %c0_9] : memref<128x128xbf16, #tpu.memory_space<vmem>>, vector<128x128xbf16>
    %cst_10 = arith.constant dense<0.000000e+00> : vector<32x128xf32>
    %17 = tpu.matmul %15, %16, %cst_10 {dimension_numbers = #tpu.dot_dimension_numbers<[1], [0], [0], [1], [0, 0, 1, 1], [], []>} : vector<32x128xbf16>, vector<128x128xbf16>, vector<32x128xf32> -> vector<32x128xf32>
    %c0_11 = arith.constant 0 : index
    %c0_12 = arith.constant 0 : index
    %18 = vector.load %arg6[%c0_11, %c0_12] : memref<1x128xf32, #tpu.memory_space<vmem>>, vector<1x128xf32>
    %19 = vector.broadcast %18 : vector<1x128xf32> to vector<32x128xf32>
    %20 = arith.addf %17, %19 : vector<32x128xf32>
    %21 = arith.truncf %20 : vector<32x128xf32> to vector<32x128xbf16>
    %c0_13 = arith.constant 0 : index
    %c0_14 = arith.constant 0 : index
    %22 = vector.load %arg7[%c0_13, %c0_14] : memref<32x128xbf16, #tpu.memory_space<vmem>>, vector<32x128xbf16>
    tpu.vector_store %arg7[%c0_13, %c0_14], %21 {strides = array<i32>} : memref<32x128xbf16, #tpu.memory_space<vmem>>, vector<32x128xbf16>,
    return
  }
  func.func @transform_0(%arg0: i32) -> (i32, i32) {
    %c0_i32 = arith.constant 0 : i32
    %c0_i32_0 = arith.constant 0 : i32
    return %arg0, %c0_i32 : i32, i32
  }
  func.func @transform_1(%arg0: i32) -> (i32, i32) {
    %c0_i32 = arith.constant 0 : i32
    %c0_i32_0 = arith.constant 0 : i32
    %c0_i32_1 = arith.constant 0 : i32
    return %c0_i32, %c0_i32_0 : i32, i32
  }
  func.func @transform_2(%arg0: i32) -> (i32, i32) {
    %c0_i32 = arith.constant 0 : i32
    %c0_i32_0 = arith.constant 0 : i32
    %c0_i32_1 = arith.constant 0 : i32
    return %c0_i32, %c0_i32_0 : i32, i32
  }
  func.func @transform_3(%arg0: i32) -> (i32, i32) {
    %c0_i32 = arith.constant 0 : i32
    %c0_i32_0 = arith.constant 0 : i32
    %c0_i32_1 = arith.constant 0 : i32
    return %c0_i32, %c0_i32_0 : i32, i32
  }
  func.func @transform_4(%arg0: i32) -> (i32, i32) {
    %c0_i32 = arith.constant 0 : i32
    %c0_i32_0 = arith.constant 0 : i32
    %c0_i32_1 = arith.constant 0 : i32
    return %c0_i32, %c0_i32_0 : i32, i32
  }
  func.func @transform_5(%arg0: i32) -> (i32, i32) {
    %c0_i32 = arith.constant 0 : i32
    %c0_i32_0 = arith.constant 0 : i32
    %c0_i32_1 = arith.constant 0 : i32
    return %c0_i32, %c0_i32_0 : i32, i32
  }
  func.func @transform_6(%arg0: i32) -> (i32, i32) {
    %c0_i32 = arith.constant 0 : i32
    %c0_i32_0 = arith.constant 0 : i32
    return %arg0, %c0_i32 : i32, i32
  }
}

</mosaic_0001>

<llo_original>
// kernel: ensemble_forward.2
$region0: #{ensemble_forward.2}
  #allocation0 [shape = 'u32[]', space=smem, size = 0x4, offset = 0x4, fixed_abs, tag = 'smem constant byte address 0x4 - core index']
  #allocation1 [shape = 'u32[144,128]{1,0:T(1,128)}', space=vmem, size = 0x12000, scoped, tag = 'internal scratch']
  #allocation2 [shape = 'u32[2048]{0}', space=vmem, size = 0x2000, scoped, tag = 'scoped memory for ensemble_forward.2']
  #allocation3 [shape = 'u32[2048]{0}', space=vmem, size = 0x2000, scoped, tag = 'scoped memory for ensemble_forward.2']
  #allocation4 [shape = 'u32[2048]{0}', space=vmem, size = 0x2000, scoped, tag = 'scoped memory for ensemble_forward.2']
  #allocation5 [shape = 'u32[2048]{0}', space=vmem, size = 0x2000, scoped, tag = 'scoped memory for ensemble_forward.2']
  #allocation6 [shape = 'u32[2048]{0}', space=vmem, size = 0x2000, scoped, tag = 'scoped memory for ensemble_forward.2']
  %s0 = inlined_call_operand.vmem [shape: bf16[128,128], index: 0, kind: input, shape index: {}]
  %s1 = inlined_call_operand.vmem [shape: f32[1,128], index: 1, kind: input, shape index: {}]
  %s2 = inlined_call_operand.vmem [shape: f32[1,128], index: 2, kind: input, shape index: {}]
  %s3 = inlined_call_operand.vmem [shape: bf16[128,128], index: 3, kind: input, shape index: {}]
  %s4 = inlined_call_operand.vmem [shape: f32[1,128], index: 4, kind: input, shape index: {}]
  %s5 = inlined_call_operand.vmem [shape: bf16[32,64], index: 5, kind: input, shape index: {}]
  %s6 = inlined_call_operand.<no memory space> [shape: bf16[], index: 6, kind: input, shape index: {}]
  %s7 = inlined_call_operand.vmem [shape: bf16[32,128], index: 7, kind: output, shape index: {}]
  %s8 = sld [smem:[#allocation0]]
  $region34: #{ensemble_forward.2} parent=0
    _
  %s10 = ssub.s32 1, %s8
  %s11 = scalar_select 0, %s10, %s8
  %v12 = vstv %s6
  %v13 = vunpack.i.l.bf16 %v12
  %v15 = vunpack.i.h.bf16 %v12
  $region1: #{ensemble_forward.2} parent=0
    #allocation7 [shape = 'u8[8192]{0}', space=vmem, size = 0x2000, dematerialized = true, scoped, tag = 'FusionAdapter Buffer %fusion.1 = bf16[32,128]{1,0:T(8,128)(2,1)} fusion(%param_5.1, %param_6), kind=kLoop, calls=%fused_computation.2.clone, metadata={op_name="jit(ensemble_forward)/jit(_pad)/pad" stack_frame_id=9}']
    // Predicated region
    $region2: #{ensemble_forward.2} parent=1 // pred_check
      _
    $region3: #{ensemble_forward.2} parent=1 // pred_check_branch
      %18 = sbr.rel (0) target = $region5
    $region4: #{ensemble_forward.2} parent=1 // pred_region
      _
    $region5: #{ensemble_forward.2} parent=1 // pred_fallthru
      _
    // Predicated region
    $region6: #{ensemble_forward.2} parent=1 // pred_check
      _
    $region7: #{ensemble_forward.2} parent=1 // pred_check_branch
      %20 = sbr.rel (0) target = $region9
    $region8: #{ensemble_forward.2} parent=1 // pred_region
      _
    $region9: #{ensemble_forward.2} parent=1 // pred_fallthru
      _
    // Predicated region
    $region10: #{ensemble_forward.2} parent=1 // pred_check
      _
    $region11: #{ensemble_forward.2} parent=1 // pred_check_branch
      %22 = sbr.rel (0) target = $region13
    $region12: #{ensemble_forward.2} parent=1 // pred_region
      _
    $region13: #{ensemble_forward.2} parent=1 // pred_fallthru
      _
    // Predicated region
    $region14: #{ensemble_forward.2} parent=1 // pred_check
      _
    $region15: #{ensemble_forward.2} parent=1 // pred_check_branch
      %24 = sbr.rel (0) target = $region17
    $region16: #{ensemble_forward.2} parent=1 // pred_region
      _
    $region17: #{ensemble_forward.2} parent=1 // pred_fallthru
      _
    // Predicated region
    $region18: #{ensemble_forward.2} parent=1 // pred_check
      _
    $region19: #{ensemble_forward.2} parent=1 // pred_check_branch
      %26 = sbr.rel (0) target = $region21
    $region20: #{ensemble_forward.2} parent=1 // pred_region
      _
    $region21: #{ensemble_forward.2} parent=1 // pred_fallthru
      _
    // Predicated region
    $region22: #{ensemble_forward.2} parent=1 // pred_check
      _
    $region23: #{ensemble_forward.2} parent=1 // pred_check_branch
      %28 = sbr.rel (0) target = $region25
    $region24: #{ensemble_forward.2} parent=1 // pred_region
      _
    $region25: #{ensemble_forward.2} parent=1 // pred_fallthru
      _
    %s30 = sor.u32 255, 127
    %s31 = sand.u32 %s30, 85
    %s32 = sshrl.u32 %s31, 1
    %s33 = sor.u32 %s31, %s32
    %s34 = sand.u32 51, %s33
    %s35 = sshrl.u32 %s34, 2
    %s36 = sor.u32 %s34, %s35
    %s37 = sand.u32 15, %s36
    %v38 = vld [vmem:[%s5] sm:%s37]
    %v39 = vunpack.c.l.bf16 %v38
    %v40 = vunpack.c.h.bf16 %v38
    %v41 = vlaneseq
    %v42 = vand.u32 %v41, 127
    %vm44 = vcmp.lt.s32.totalorder %v42, 64
    %v45 = vsel %vm44, %v39, %v13
    %v46 = vpack.c.bf16 0.0, %v45
    %48 = vst [vmem:[#allocation7] sm:$0xf] %v46
    %s49 = scalar_lea.vmem %s5, 4
    %s51 = sor.u32 255, 127
    %s52 = sand.u32 %s51, 85
    %s53 = sshrl.u32 %s52, 1
    %s54 = sor.u32 %s52, %s53
    %s55 = sand.u32 51, %s54
    %s56 = sshrl.u32 %s55, 2
    %s57 = sor.u32 %s55, %s56
    %s58 = sand.u32 15, %s57
    %v59 = vld [vmem:[%s49] sm:%s58]
    %v60 = vunpack.c.l.bf16 %v59
    %v61 = vunpack.c.h.bf16 %v59
    %v62 = vlaneseq
    %v63 = vand.u32 %v62, 127
    %vm65 = vcmp.lt.s32.totalorder %v63, 64
    %v66 = vsel %vm65, %v60, %v13
    %s67 = scalar_lea.vmem [#allocation7], 4
    %v68 = vpack.c.bf16 0.0, %v66
    %70 = vst [vmem:[%s67] sm:$0xf] %v68
    %s71 = scalar_lea.vmem %s5, 8
    %s73 = sor.u32 255, 127
    %s74 = sand.u32 %s73, 85
    %s75 = sshrl.u32 %s74, 1
    %s76 = sor.u32 %s74, %s75
    %s77 = sand.u32 51, %s76
    %s78 = sshrl.u32 %s77, 2
    %s79 = sor.u32 %s77, %s78
    %s80 = sand.u32 15, %s79
    %v81 = vld [vmem:[%s71] sm:%s80]
    %v82 = vunpack.c.l.bf16 %v81
    %v83 = vunpack.c.h.bf16 %v81
    %v84 = vlaneseq
    %v85 = vand.u32 %v84, 127
    %vm87 = vcmp.lt.s32.totalorder %v85, 64
    %v88 = vsel %vm87, %v82, %v13
    %s89 = scalar_lea.vmem [#allocation7], 8
    %v90 = vpack.c.bf16 0.0, %v88
    %92 = vst [vmem:[%s89] sm:$0xf] %v90
    %s93 = scalar_lea.vmem %s5, 12
    %s95 = sor.u32 255, 127
    %s96 = sand.u32 %s95, 85
    %s97 = sshrl.u32 %s96, 1
    %s98 = sor.u32 %s96, %s97
    %s99 = sand.u32 51, %s98
    %s100 = sshrl.u32 %s99, 2
    %s101 = sor.u32 %s99, %s100
    %s102 = sand.u32 15, %s101
    %v103 = vld [vmem:[%s93] sm:%s102]
    %v104 = vunpack.c.l.bf16 %v103
    %v105 = vunpack.c.h.bf16 %v103
    %v106 = vlaneseq
    %v107 = vand.u32 %v106, 127
    %vm109 = vcmp.lt.s32.totalorder %v107, 64
    %v110 = vsel %vm109, %v104, %v13
    %s111 = scalar_lea.vmem [#allocation7], 12
    %v112 = vpack.c.bf16 0.0, %v110
    %114 = vst [vmem:[%s111] sm:$0xf] %v112
    %v116 = vld [vmem:[#allocation7] sm:$0xf]
    %v117 = vld [vmem:[#allocation7 + $0x4] sm:$0xf]
    %v118 = vld [vmem:[#allocation7 + $0x8] sm:$0xf]
    %v119 = vld [vmem:[#allocation7 + $0xc] sm:$0xf]
    %v120 = vld [vmem:[%s0] sm:$0xf]
    %v121 = vld [vmem:[%s0 + $0x4] sm:$0xf]
    %v122 = vld [vmem:[%s0 + $0x8] sm:$0xf]
    %v123 = vld [vmem:[%s0 + $0xc] sm:$0xf]
    %v124 = vld [vmem:[%s0 + $0x10] sm:$0xf]
    %v125 = vld [vmem:[%s0 + $0x14] sm:$0xf]
    %v126 = vld [vmem:[%s0 + $0x18] sm:$0xf]
    %v127 = vld [vmem:[%s0 + $0x1c] sm:$0xf]
    %v128 = vld [vmem:[%s0 + $0x20] sm:$0xf]
    %v129 = vld [vmem:[%s0 + $0x24] sm:$0xf]
    %v130 = vld [vmem:[%s0 + $0x28] sm:$0xf]
    %v131 = vld [vmem:[%s0 + $0x2c] sm:$0xf]
    %v132 = vld [vmem:[%s0 + $0x30] sm:$0xf]
    %v133 = vld [vmem:[%s0 + $0x34] sm:$0xf]
    %v134 = vld [vmem:[%s0 + $0x38] sm:$0xf]
    %v135 = vld [vmem:[%s0 + $0x3c] sm:$0xf]
    %v136 = vld [vmem:[%s1] sm:$0x1]
    %v138 = vlaneseq
    %v139 = vshrl.u32 %v138, 7
    %v140 = vsub.s32 0, %v139
    %v141 = vrot.slane %v136, %v140
    %v147 = vunpack.c.l.b16 %v116
    %v148 = vunpack.c.l.b16 %v117
    %v149 = vunpack.c.l.b16 %v118
    %v150 = vunpack.c.l.b16 %v119
    %v151 = vpack.c.b16 %v148, %v147
    %v152 = vpack.c.b16 %v150, %v149
    %v171 = vunpack.c.l.b16 %v120
    %v172 = vunpack.c.l.b16 %v121
    %v173 = vunpack.c.l.b16 %v122
    %v174 = vunpack.c.l.b16 %v123
    %v175 = vunpack.c.l.b16 %v124
    %v176 = vunpack.c.l.b16 %v125
    %v177 = vunpack.c.l.b16 %v126
    %v178 = vunpack.c.l.b16 %v127
    %v179 = vunpack.c.l.b16 %v128
    %v180 = vunpack.c.l.b16 %v129
    %v181 = vunpack.c.l.b16 %v130
    %v182 = vunpack.c.l.b16 %v131
    %v183 = vunpack.c.l.b16 %v132
    %v184 = vunpack.c.l.b16 %v133
    %v185 = vunpack.c.l.b16 %v134
    %v186 = vunpack.c.l.b16 %v135
    %v187 = vpack.c.b16 %v172, %v171
    %v188 = vpack.c.b16 %v174, %v173
    %v189 = vpack.c.b16 %v176, %v175
    %v190 = vpack.c.b16 %v178, %v177
    %v191 = vpack.c.b16 %v180, %v179
    %v192 = vpack.c.b16 %v182, %v181
    %v193 = vpack.c.b16 %v184, %v183
    %v194 = vpack.c.b16 %v186, %v185
    %203 = vmatprep.subr.bf16.mxu0 0
    %204 = vmatpush1.bf16.msra.mxu0 %v187
    %205 = vmatprep.subr.bf16.mxu0 0
    %206 = vmatpush1.bf16.msra.mxu0 %v188
    %207 = vmatprep.subr.bf16.mxu0 0
    %208 = vmatpush1.bf16.msra.mxu0 %v189
    %209 = vmatprep.subr.bf16.mxu0 0
    %210 = vmatpush1.bf16.msra.mxu0 %v190
    %211 = vmatprep.subr.bf16.mxu0 0
    %212 = vmatpush1.bf16.msra.mxu0 %v191
    %213 = vmatprep.subr.bf16.mxu0 0
    %214 = vmatpush1.bf16.msra.mxu0 %v192
    %215 = vmatprep.subr.bf16.mxu0 0
    %216 = vmatpush1.bf16.msra.mxu0 %v193
    %217 = vmatprep.subr.bf16.mxu0 0
    %218 = vmatpush1.bf16.msra.mxu0 %v194
    %219 = vmatprep.subr.bf16.mxu0 0
    %220 = vmatpush1.bf16.msra.mxu0 0
    %221 = vmatprep.subr.bf16.mxu0 0
    %222 = vmatpush1.bf16.msra.mxu0 0
    %223 = vmatprep.subr.bf16.mxu0 0
    %224 = vmatpush1.bf16.msra.mxu0 0
    %225 = vmatprep.subr.bf16.mxu0 0
    %226 = vmatpush1.bf16.msra.mxu0 0
    %227 = vmatprep.subr.bf16.mxu0 0
    %228 = vmatpush1.bf16.msra.mxu0 0
    %229 = vmatprep.subr.bf16.mxu0 0
    %230 = vmatpush1.bf16.msra.mxu0 0
    %231 = vmatprep.subr.bf16.mxu0 0
    %232 = vmatpush1.bf16.msra.mxu0 0
    %233 = vmatprep.subr.bf16.mxu0 0
    %234 = vmatpush1.bf16.msra.mxu0 0
    %235 = vmatprep.mubr.bf16.mxu0 0
    %236 = vmatmul.mubr.bf16.gmra.mrb[0].mxu0 %v151
    %v237 = vpop.f32.mrb[0].mxu0
    %v238 = vadd.f32 %v141, %v237
    %v239 = vpop.f32.mrb[0].mxu0
    %v240 = vpop.f32.mrb[0].mxu0
    %v241 = vadd.f32 %v141, %v240
    %v242 = vpop.f32.mrb[0].mxu0
    %243 = vmatprep.mubr.bf16.mxu0 0
    %244 = vmatmul.mubr.bf16.gmra.mrb[0].mxu0 %v152
    %v245 = vpop.f32.mrb[0].mxu0
    %v246 = vadd.f32 %v141, %v245
    %v247 = vpop.f32.mrb[0].mxu0
    %v248 = vpop.f32.mrb[0].mxu0
    %v249 = vadd.f32 %v141, %v248
    %v250 = vpop.f32.mrb[0].mxu0
    %251 = vdwg.mxu0
    %v252 = vld [vmem:[%s2] sm:$0x1]
    %v254 = vlaneseq
    %v255 = vshrl.u32 %v254, 7
    %v256 = vsub.s32 0, %v255
    %v257 = vrot.slane %v252, %v256
    %v259 = vmul.f32 %v238, %v257
    %v260 = vmul.f32 %v241, %v257
    %v261 = vmul.f32 %v246, %v257
    %v262 = vmul.f32 %v249, %v257
    %v263 = vxor.u32 %v259, 2147483648
    %v264 = vxor.u32 %v260, 2147483648
    %v265 = vxor.u32 %v261, 2147483648
    %v266 = vxor.u32 %v262, 2147483648
    %v267 = vmul.f32 %v263, 1.442695
    %v268 = vpow.pop %v267
    %v269 = vmul.f32 %v264, 1.442695
    %v270 = vpow.pop %v269
    %v271 = vmul.f32 %v265, 1.442695
    %v272 = vpow.pop %v271
    %v273 = vmul.f32 %v266, 1.442695
    %v274 = vpow.pop %v273
    %v275 = vadd.f32 %v268, 1.0
    %v276 = vadd.f32 %v270, 1.0
    %v277 = vadd.f32 %v272, 1.0
    %v278 = vadd.f32 %v274, 1.0
    %v279 = vrcp.pop %v275
    %v280 = vmul.f32 1.0, %v279
    %v281 = vrcp.pop %v276
    %v282 = vmul.f32 1.0, %v281
    %v283 = vrcp.pop %v277
    %v284 = vmul.f32 1.0, %v283
    %v285 = vrcp.pop %v278
    %v286 = vmul.f32 1.0, %v285
    %v287 = vmul.f32 %v238, %v280
    %v288 = vmul.f32 %v241, %v282
    %v289 = vmul.f32 %v246, %v284
    %v290 = vmul.f32 %v249, %v286
    %v291 = vpack.c.bf16 %v288, %v287
    %v292 = vpack.c.bf16 %v290, %v289
    %v293 = vld [vmem:[%s3] sm:$0xf]
    %v294 = vld [vmem:[%s3 + $0x4] sm:$0xf]
    %v295 = vld [vmem:[%s3 + $0x8] sm:$0xf]
    %v296 = vld [vmem:[%s3 + $0xc] sm:$0xf]
    %v297 = vld [vmem:[%s3 + $0x10] sm:$0xf]
    %v298 = vld [vmem:[%s3 + $0x14] sm:$0xf]
    %v299 = vld [vmem:[%s3 + $0x18] sm:$0xf]
    %v300 = vld [vmem:[%s3 + $0x1c] sm:$0xf]
    %v301 = vld [vmem:[%s3 + $0x20] sm:$0xf]
    %v302 = vld [vmem:[%s3 + $0x24] sm:$0xf]
    %v303 = vld [vmem:[%s3 + $0x28] sm:$0xf]
    %v304 = vld [vmem:[%s3 + $0x2c] sm:$0xf]
    %v305 = vld [vmem:[%s3 + $0x30] sm:$0xf]
    %v306 = vld [vmem:[%s3 + $0x34] sm:$0xf]
    %v307 = vld [vmem:[%s3 + $0x38] sm:$0xf]
    %v308 = vld [vmem:[%s3 + $0x3c] sm:$0xf]
    %v309 = vld [vmem:[%s4] sm:$0x1]
    %v311 = vlaneseq
    %v312 = vshrl.u32 %v311, 7
    %v313 = vsub.s32 0, %v312
    %v314 = vrot.slane %v309, %v313
    %v332 = vunpack.c.l.b16 %v293
    %v333 = vunpack.c.l.b16 %v294
    %v334 = vunpack.c.l.b16 %v295
    %v335 = vunpack.c.l.b16 %v296
    %v336 = vunpack.c.l.b16 %v297
    %v337 = vunpack.c.l.b16 %v298
    %v338 = vunpack.c.l.b16 %v299
    %v339 = vunpack.c.l.b16 %v300
    %v340 = vunpack.c.l.b16 %v301
    %v341 = vunpack.c.l.b16 %v302
    %v342 = vunpack.c.l.b16 %v303
    %v343 = vunpack.c.l.b16 %v304
    %v344 = vunpack.c.l.b16 %v305
    %v345 = vunpack.c.l.b16 %v306
    %v346 = vunpack.c.l.b16 %v307
    %v347 = vunpack.c.l.b16 %v308
    %v348 = vpack.c.b16 %v333, %v332
    %v349 = vpack.c.b16 %v335, %v334
    %v350 = vpack.c.b16 %v337, %v336
    %v351 = vpack.c.b16 %v339, %v338
    %v352 = vpack.c.b16 %v341, %v340
    %v353 = vpack.c.b16 %v343, %v342
    %v354 = vpack.c.b16 %v345, %v344
    %v355 = vpack.c.b16 %v347, %v346
    %364 = vmatprep.subr.bf16.mxu0 0
    %365 = vmatpush1.bf16.msra.mxu0 %v348
    %366 = vmatprep.subr.bf16.mxu0 0
    %367 = vmatpush1.bf16.msra.mxu0 %v349
    %368 = vmatprep.subr.bf16.mxu0 0
    %369 = vmatpush1.bf16.msra.mxu0 %v350
    %370 = vmatprep.subr.bf16.mxu0 0
    %371 = vmatpush1.bf16.msra.mxu0 %v351
    %372 = vmatprep.subr.bf16.mxu0 0
    %373 = vmatpush1.bf16.msra.mxu0 %v352
    %374 = vmatprep.subr.bf16.mxu0 0
    %375 = vmatpush1.bf16.msra.mxu0 %v353
    %376 = vmatprep.subr.bf16.mxu0 0
    %377 = vmatpush1.bf16.msra.mxu0 %v354
    %378 = vmatprep.subr.bf16.mxu0 0
    %379 = vmatpush1.bf16.msra.mxu0 %v355
    %380 = vmatprep.subr.bf16.mxu0 0
    %381 = vmatpush1.bf16.msra.mxu0 0
    %382 = vmatprep.subr.bf16.mxu0 0
    %383 = vmatpush1.bf16.msra.mxu0 0
    %384 = vmatprep.subr.bf16.mxu0 0
    %385 = vmatpush1.bf16.msra.mxu0 0
    %386 = vmatprep.subr.bf16.mxu0 0
    %387 = vmatpush1.bf16.msra.mxu0 0
    %388 = vmatprep.subr.bf16.mxu0 0
    %389 = vmatpush1.bf16.msra.mxu0 0
    %390 = vmatprep.subr.bf16.mxu0 0
    %391 = vmatpush1.bf16.msra.mxu0 0
    %392 = vmatprep.subr.bf16.mxu0 0
    %393 = vmatpush1.bf16.msra.mxu0 0
    %394 = vmatprep.subr.bf16.mxu0 0
    %395 = vmatpush1.bf16.msra.mxu0 0
    %396 = vmatprep.mubr.bf16.mxu0 0
    %397 = vmatmul.mubr.bf16.gmra.mrb[0].mxu0 %v291
    %v398 = vpop.f32.mrb[0].mxu0
    %v399 = vadd.f32 %v314, %v398
    %v400 = vpop.f32.mrb[0].mxu0
    %v401 = vpop.f32.mrb[0].mxu0
    %v402 = vadd.f32 %v314, %v401
    %v403 = vpop.f32.mrb[0].mxu0
    %404 = vmatprep.mubr.bf16.mxu0 0
    %405 = vmatmul.mubr.bf16.gmra.mrb[0].mxu0 %v292
    %v406 = vpop.f32.mrb[0].mxu0
    %v407 = vadd.f32 %v314, %v406
    %v408 = vpop.f32.mrb[0].mxu0
    %v409 = vpop.f32.mrb[0].mxu0
    %v410 = vadd.f32 %v314, %v409
    %v411 = vpop.f32.mrb[0].mxu0
    %412 = vdwg.mxu0
    %v413 = vpack.c.bf16 %v402, %v399
    %v414 = vpack.c.bf16 %v410, %v407
    %v417 = vunpack.c.l.b16 %v413
    %v418 = vunpack.c.h.b16 %v413
    %v419 = vunpack.c.l.b16 %v414
    %v420 = vunpack.c.h.b16 %v414
    %v421 = vpack.c.b16 %v417, %v417
    %v422 = vpack.c.b16 %v418, %v418
    %v423 = vpack.c.b16 %v419, %v419
    %v424 = vpack.c.b16 %v420, %v420
    %429 = vst [vmem:[%s7] sm:$0xf] %v421
    %430 = vst [vmem:[%s7 + $0x4] sm:$0xf] %v422
    %431 = vst [vmem:[%s7 + $0x8] sm:$0xf] %v423
    %432 = vst [vmem:[%s7 + $0xc] sm:$0xf] %v424
    // Predicated region
    $region26: #{ensemble_forward.2} parent=1 // pred_check
      _
    $region27: #{ensemble_forward.2} parent=1 // pred_check_branch
      %434 = sbr.rel (0) target = $region29
    $region28: #{ensemble_forward.2} parent=1 // pred_region
      _
    $region29: #{ensemble_forward.2} parent=1 // pred_fallthru
      _
    // Predicated region
    $region30: #{ensemble_forward.2} parent=1 // pred_check
      _
    $region31: #{ensemble_forward.2} parent=1 // pred_check_branch
      %436 = sbr.rel (0) target = $region33
    $region32: #{ensemble_forward.2} parent=1 // pred_region
      _
    $region33: #{ensemble_forward.2} parent=1 // pred_fallthru
      _

</llo_original>
